<compile_context>
chip_gen: v6e
topology: v6e:2x2x1
jax: 0.10.0
libtpu: 0.0.40
codegen_flags: <defaults>
</compile_context>

<pallas_src>
import functools

import jax
import jax.numpy as jnp
from jax import lax
from jax.experimental import pallas as pl
from jax.experimental.pallas import tpu as pltpu


# ----------------------------------------------------------------------------- helpers
def _round_up(x, m):
    return -(-int(x) // int(m)) * int(m)


def _padded_bytes(shape, itemsize):
    """Conservative VMEM footprint: 2nd-last dim padded to 8, last to 128."""
    shape = tuple(int(d) for d in shape)
    if len(shape) == 1:
        shape = (1,) + shape
    lead = 1
    for d in shape[:-2]:
        lead *= d
    return lead * _round_up(shape[-2], 8) * _round_up(shape[-1], 128) * itemsize


def _vmem_capacity_bytes():
    try:
        return int(pltpu.get_tpu_info().vmem_capacity_bytes)
    except Exception:
        kind = jax.devices()[0].device_kind.lower()
        return (64 << 20) if "v7" in kind else (128 << 20)


def _pick_quant_dtype():
    """int8 MXU on v5e/v6e (exact for one-hot selection), bf16 on v7x, f32 else."""
    kind = jax.devices()[0].device_kind.lower()
    if "v7" in kind:
        return "bfloat16"
    if ("v5" in kind) or ("v6" in kind) or ("lite" in kind):
        return "int8"
    return "float32"


def _choose_tiles(bn, cv, l, o_pad, lut_itemsize, budget_bytes):
    """Pick (TM, TN): MXU-friendly row tiles, O tiling only when needed."""
    tn_cands = [t for t in (o_pad, 2048, 1024, 512, 256, 128)
                if t <= o_pad and o_pad % t == 0]
    tm_cands = (1024, 512, 256, 128, 64, 32, 16, 8)
    bn8 = _round_up(bn, 8)
    for tn in tn_cands:
        lut_bufs = 1 if tn == o_pad else 2            # resident vs streamed LUT
        resident = (lut_bufs * _padded_bytes((l, tn), lut_itemsize)
                    + _padded_bytes((cv, l), 4)        # block-diag centroids (1 buf)
                    + 2 * _padded_bytes((2, tn), 4))   # bias / scale rows
        for tm in tm_cands:
            tm_eff = min(tm, bn8)
            stream = (2 * _padded_bytes((tm_eff, cv), 4)      # x tiles
                      + 2 * _padded_bytes((tm_eff, tn), 4))   # output tiles
            interm = (7 * _padded_bytes((tm_eff, l), 4)       # sim / rolls / onehot
                      + _padded_bytes((tm_eff, tn), 4))       # matmul accumulator
            if resident + stream + interm <= budget_bytes:
                return tm_eff, tn
    return min(8, bn8), 128


def _quantize_lut(lut):
    """int8 symmetric per-tensor quantization (z = 0), as in the torch module."""
    a = jnp.min(lut)
    b = jnp.max(lut)
    max_abs = jnp.maximum(jnp.abs(a), jnp.abs(b))
    s = jnp.maximum(max_abs / 127.0, jnp.finfo(jnp.float32).tiny)
    q = jnp.round(jnp.clip(lut / s, -128.0, 127.0)).astype(jnp.int8)
    return q, s


# ----------------------------------------------------------------------------- kernel
def _segment_allreduce(x, lane_in_seg, seg, binop):
    """All-reduce `binop` within contiguous K-wide lane segments via pltpu.roll
    (log2(seg) doubling steps on the XLU; sources never cross segment bounds)."""
    L = x.shape[-1]
    s = 1
    while s < seg:
        lo = pltpu.roll(x, shift=s % L, axis=1)            # source lane j - s
        hi = pltpu.roll(x, shift=(s - seg) % L, axis=1)    # source lane j - s + seg
        x = binop(x, jnp.where(lane_in_seg < s, hi, lo))
        s *= 2
    return x


def _amm_linear_kernel(x_ref, bd_ref, lut_ref, epi_ref, o_ref, *,
                       k, lut_dtype, acc_dtype):
    """One (row, O) tile.

    x_ref:   (TM, C*V)  inputs (lane-dense, no codebook transpose)
    bd_ref:  (C*V, L)   block-diagonal centroids^T (resident)
    lut_ref: (L, TN)    quantized fused LUT (int8 / bf16 / f32)
    epi_ref: (2, TN)    row 0 = bias, row 1 = dequant scale
    o_ref:   (TM, TN)
    """
    # similarity for all codebooks in ONE lane-dense MXU matmul (kept f32 so the
    # argmax matches the f32 reference).
    sim = jnp.dot(x_ref[...], bd_ref[...], preferred_element_type=jnp.float32)

    lane = lax.broadcasted_iota(jnp.int32, sim.shape, 1)
    lane_in_seg = jnp.bitwise_and(lane, k - 1)             # k is a power of two

    # per-segment argmax -> one-hot (first-occurrence tie-break)
    seg_max = _segment_allreduce(sim, lane_in_seg, k, jnp.maximum)
    idx_cand = jnp.where(sim == seg_max, lane_in_seg, k)
    seg_arg = _segment_allreduce(idx_cand, lane_in_seg, k, jnp.minimum)
    onehot = jnp.where(lane_in_seg == seg_arg, 1, 0).astype(lut_dtype)

    # fused quantized path: single deep matmul (contraction depth C*K)
    acc = jnp.dot(onehot, lut_ref[...], preferred_element_type=acc_dtype)

    # epilogue: dequant scale + bias (forward value of real-(real-quant) is quant)
    out = acc.astype(jnp.float32) * epi_ref[1:2, :] + epi_ref[0:1, :]
    o_ref[...] = out.astype(o_ref.dtype)


# ----------------------------------------------------------------------------- wrapper
@functools.partial(jax.jit, static_argnames=("quant_dtype", "conservative"))
def amm_linear_forward(x, centroids, weight, inverse_temperature_logit, bias,
                       *, quant_dtype="float32", conservative=False):
    """x: (batch, seq, in_features) -> (batch, seq, out_features).

    `inverse_temperature_logit` does not affect the forward value (the softmax
    branch cancels); kept for API parity with the PyTorch module.
    """
    del inverse_temperature_logit
    f32 = jnp.float32
    batch, seq, in_features = x.shape
    C, K, V = centroids.shape
    O = weight.shape[-1]
    assert in_features == C * V
    assert K & (K - 1) == 0, "k must be a power of two"  # TODO(synk): general k
    BN = batch * seq
    CV = C * V

    x2 = x.reshape(BN, CV).astype(f32)                    # no transpose of x

    # fused LUT + int8 quantization (mirrors the torch.no_grad() preprocessing)
    fused_lut = jnp.einsum('ckv,cvo->cko',
                           centroids.astype(f32), weight.astype(f32))  # (C, K, O)
    q, s = _quantize_lut(fused_lut)

    if quant_dtype == "int8":
        lut2 = q.reshape(C * K, O)
        scale = s
        lut_dtype, acc_dtype = jnp.int8, jnp.int32
    elif quant_dtype == "bfloat16":
        lut2 = (q.astype(f32) * s).astype(jnp.bfloat16).reshape(C * K, O)
        scale = jnp.float32(1.0)
        lut_dtype, acc_dtype = jnp.bfloat16, jnp.float32
    else:
        lut2 = (q.astype(f32) * s).reshape(C * K, O)
        scale = jnp.float32(1.0)
        lut_dtype, acc_dtype = jnp.float32, jnp.float32

    # lane-dense padding: O -> O_pad, C*K -> L (padded LUT rows are zero, so the
    # one-hots of padding "segments" contribute nothing)
    O_pad = _round_up(O, 128)
    L = _round_up(C * K, 128)
    lut2 = jnp.pad(lut2, ((0, L - C * K), (0, O_pad - O)))
    epi = jnp.stack([
        jnp.pad(bias.astype(f32), (0, O_pad - O)),         # row 0: bias
        jnp.full((O_pad,), scale, dtype=f32),              # row 1: dequant scale
    ])                                                     # (2, O_pad)

    # block-diagonal centroids^T: bd[c*V+v, c*K+k] = centroids[c, k, v]
    eye_c = jnp.eye(C, dtype=f32)
    bd = (eye_c[:, None, :, None] *
          centroids.astype(f32).transpose(0, 2, 1)[:, :, None, :]
          ).reshape(CV, C * K)
    bd = jnp.pad(bd, ((0, 0), (0, L - C * K)))             # (CV, L)

    # generation-aware tiling / VMEM budgets
    cap = _vmem_capacity_bytes()
    budget = int(cap * (0.40 if conservative else 0.55))
    TM, TN = _choose_tiles(BN, CV, L, O_pad, jnp.dtype(lut_dtype).itemsize, budget)
    BN_pad = _round_up(BN, TM)
    if BN_pad != BN:
        x2 = jnp.pad(x2, ((0, BN_pad - BN), (0, 0)))
    n_i, n_j = BN_pad // TM, O_pad // TN

    def make_spec(shape, index_map, resident):
        if resident and (not conservative) and hasattr(pl, "Buffered"):
            try:
                return pl.BlockSpec(shape, index_map, pipeline_mode=pl.Buffered(1))
            except TypeError:
                pass
        return pl.BlockSpec(shape, index_map)

    kernel = functools.partial(_amm_linear_kernel, k=K,
                               lut_dtype=lut_dtype, acc_dtype=acc_dtype)

    out = pl.pallas_call(
        kernel,
        out_shape=jax.ShapeDtypeStruct((BN_pad, O_pad), f32),
        grid_spec=pltpu.PrefetchScalarGridSpec(
            num_scalar_prefetch=0,
            grid=(n_i, n_j),
            in_specs=[
                pl.BlockSpec((TM, CV), lambda i, j: (i, 0)),            # x (streamed)
                make_spec((CV, L), lambda i, j: (0, 0), resident=True),  # block-diag
                make_spec((L, TN), lambda i, j: (0, j), resident=(n_j == 1)),   # LUT
                make_spec((2, TN), lambda i, j: (0, j), resident=(n_j == 1)),   # bias/scale
            ],
            out_specs=pl.BlockSpec((TM, TN), lambda i, j: (i, j)),
        ),
        compiler_params=pltpu.CompilerParams(
            dimension_semantics=("parallel", "parallel"),
            vmem_limit_bytes=int(cap * 0.8)),
    )(x2, bd, lut2, epi)

    # TODO(synk): drop this slice (extra HBM pass) if the consumer can take the
    #             padded slab.
    return out[:BN, :O].reshape(batch, seq, O)


# ----------------------------------------------------------------------------- reference
def amm_linear_reference(x, centroids, weight, inverse_temperature_logit, bias):
    """Faithful JAX port of AMMLinear.forward (incl. the cancelled softmax path)."""
    batch, seq, _ = x.shape
    C, K, V = centroids.shape
    O = weight.shape[-1]
    BN = batch * seq
    xr = x.reshape(BN, C, V).transpose(1, 0, 2)                 # (C, BN, V)
    sim = jnp.einsum('cbv,ckv->cbk', xr, centroids)             # (C, BN, K)
    lut = jnp.einsum('ckv,cvo->cko', centroids, weight)         # (C, K, O)
    q, s = _quantize_lut(lut)
    dq_lut = q.astype(jnp.float32) * s
    scale_t = jax.nn.softplus(inverse_temperature_logit[0]) + 1.0
    attn = jax.nn.softmax(sim * scale_t, axis=-1)
    real = jnp.einsum('cbk,cko->bo', attn, lut)
    onehot = jax.nn.one_hot(jnp.argmax(sim, axis=-1), K, dtype=jnp.float32)
    quant = jnp.einsum('cbk,cko->bo', onehot, dq_lut)
    out = real - (real - quant) + bias[None, :]
    return out.reshape(batch, seq, O)


# ----------------------------------------------------------------------------- main
if __name__ == "__main__":
    # AMMLinear(ncodebooks=4, in_features=32, out_features=32, bias=True, k=16)
    ncodebooks, in_features, out_features, k = 4, 32, 32, 16
    subvec_len = in_features // ncodebooks
    batch, seq = 2, 8

    key = jax.random.PRNGKey(0)
    k_x, k_c, k_w, k_t, k_b = jax.random.split(key, 5)
    x = jax.random.normal(k_x, (batch, seq, in_features), dtype=jnp.float32)
    centroids = jax.random.normal(k_c, (ncodebooks, k, subvec_len), dtype=jnp.float32)
    weight = jax.random.normal(k_w, (ncodebooks, subvec_len, out_features), dtype=jnp.float32)
    itl = jax.random.normal(k_t, (1,), dtype=jnp.float32)
    bias = jax.random.normal(k_b, (out_features,), dtype=jnp.float32)

    qdt = _pick_quant_dtype()
    try:
        out = jax.block_until_ready(
            amm_linear_forward(x, centroids, weight, itl, bias, quant_dtype=qdt))
    except Exception:
        # Conservative fallback (f32 MXU path, default buffering) for TPU
        # generations / JAX versions where the fast path does not lower.
        qdt = "float32"
        out = jax.block_until_ready(
            amm_linear_forward(x, centroids, weight, itl, bias,
                               quant_dtype=qdt, conservative=True))

    ref = amm_linear_reference(x, centroids, weight, itl, bias)
    tol = 5e-2 if qdt == "bfloat16" else 1e-3   # bf16 LUT rounding on v7x
    assert out.shape == (batch, seq, out_features)
    assert jnp.allclose(out, ref, atol=tol, rtol=tol), (
        f"max abs err {float(jnp.max(jnp.abs(out - ref)))}")

    print("KERNEL_OK")
</pallas_src>

<mosaic_0001>
module attributes {stable_mosaic.version = 11 : i64} {
  func.func @_amm_linear_kernel(%arg0: i32, %arg1: i32, %arg2: memref<16x32xf32, #tpu.memory_space<vmem>>, %arg3: memref<32x128xf32, #tpu.memory_space<vmem>>, %arg4: memref<128x128xf32, #tpu.memory_space<vmem>>, %arg5: memref<2x128xf32, #tpu.memory_space<vmem>>, %arg6: memref<16x128xf32, #tpu.memory_space<vmem>>) attributes {dimension_semantics = [#tpu.dimension_semantics<parallel>, #tpu.dimension_semantics<parallel>], iteration_bounds = array<i64: 1, 1>, scalar_prefetch = 0 : i64, scratch_operands = 0 : i64, tpu.core_type = #tpu.core_type<tc>, window_params = [{transform_indices = @transform_0, window_bounds = array<i64: 16, 32>}, {pipeline_mode = #tpu.pipeline_mode<synchronous>, transform_indices = @transform_1, window_bounds = array<i64: 32, 128>}, {pipeline_mode = #tpu.pipeline_mode<synchronous>, transform_indices = @transform_2, window_bounds = array<i64: 128, 128>}, {pipeline_mode = #tpu.pipeline_mode<synchronous>, transform_indices = @transform_3, window_bounds = array<i64: 2, 128>}, {transform_indices = @transform_4, window_bounds = array<i64: 16, 128>}]} {
    %c0 = arith.constant 0 : index
    %c0_0 = arith.constant 0 : index
    %0 = vector.load %arg2[%c0, %c0_0] : memref<16x32xf32, #tpu.memory_space<vmem>>, vector<16x32xf32>
    %c0_1 = arith.constant 0 : index
    %c0_2 = arith.constant 0 : index
    %1 = vector.load %arg3[%c0_1, %c0_2] : memref<32x128xf32, #tpu.memory_space<vmem>>, vector<32x128xf32>
    %cst = arith.constant dense<0.000000e+00> : vector<16x128xf32>
    %2 = tpu.matmul %0, %1, %cst {dimension_numbers = #tpu.dot_dimension_numbers<[1], [0], [0], [1], [0, 0, 1, 1], [], []>} : vector<16x32xf32>, vector<32x128xf32>, vector<16x128xf32> -> vector<16x128xf32>
    %3 = tpu.iota {dimensions = array<i32: 1>} : vector<16x128xi32>
    %c15_i32 = arith.constant 15 : i32
    %4 = vector.broadcast %c15_i32 : i32 to vector<16x128xi32>
    %5 = arith.andi %3, %4 : vector<16x128xi32>
    %c1_i32 = arith.constant 1 : i32
    %6 = tpu.dynamic_rotate %2 by %c1_i32 dim 1 : vector<16x128xf32>, i32 -> vector<16x128xf32>
    %c113_i32 = arith.constant 113 : i32
    %7 = tpu.dynamic_rotate %2 by %c113_i32 dim 1 : vector<16x128xf32>, i32 -> vector<16x128xf32>
    %c1_i32_3 = arith.constant 1 : i32
    %8 = vector.broadcast %c1_i32_3 : i32 to vector<16x128xi32>
    %9 = arith.cmpi slt, %5, %8 : vector<16x128xi32>
    %10 = arith.select %9, %7, %6 : vector<16x128xi1>, vector<16x128xf32>
    %11 = arith.maximumf %2, %10 : vector<16x128xf32>
    %c2_i32 = arith.constant 2 : i32
    %12 = tpu.dynamic_rotate %11 by %c2_i32 dim 1 : vector<16x128xf32>, i32 -> vector<16x128xf32>
    %c114_i32 = arith.constant 114 : i32
    %13 = tpu.dynamic_rotate %11 by %c114_i32 dim 1 : vector<16x128xf32>, i32 -> vector<16x128xf32>
    %c2_i32_4 = arith.constant 2 : i32
    %14 = vector.broadcast %c2_i32_4 : i32 to vector<16x128xi32>
    %15 = arith.cmpi slt, %5, %14 : vector<16x128xi32>
    %16 = arith.select %15, %13, %12 : vector<16x128xi1>, vector<16x128xf32>
    %17 = arith.maximumf %11, %16 : vector<16x128xf32>
    %c4_i32 = arith.constant 4 : i32
    %18 = tpu.dynamic_rotate %17 by %c4_i32 dim 1 : vector<16x128xf32>, i32 -> vector<16x128xf32>
    %c116_i32 = arith.constant 116 : i32
    %19 = tpu.dynamic_rotate %17 by %c116_i32 dim 1 : vector<16x128xf32>, i32 -> vector<16x128xf32>
    %c4_i32_5 = arith.constant 4 : i32
    %20 = vector.broadcast %c4_i32_5 : i32 to vector<16x128xi32>
    %21 = arith.cmpi slt, %5, %20 : vector<16x128xi32>
    %22 = arith.select %21, %19, %18 : vector<16x128xi1>, vector<16x128xf32>
    %23 = arith.maximumf %17, %22 : vector<16x128xf32>
    %c8_i32 = arith.constant 8 : i32
    %24 = tpu.dynamic_rotate %23 by %c8_i32 dim 1 : vector<16x128xf32>, i32 -> vector<16x128xf32>
    %c120_i32 = arith.constant 120 : i32
    %25 = tpu.dynamic_rotate %23 by %c120_i32 dim 1 : vector<16x128xf32>, i32 -> vector<16x128xf32>
    %c8_i32_6 = arith.constant 8 : i32
    %26 = vector.broadcast %c8_i32_6 : i32 to vector<16x128xi32>
    %27 = arith.cmpi slt, %5, %26 : vector<16x128xi32>
    %28 = arith.select %27, %25, %24 : vector<16x128xi1>, vector<16x128xf32>
    %29 = arith.maximumf %23, %28 : vector<16x128xf32>
    %30 = arith.cmpf oeq, %2, %29 : vector<16x128xf32>
    %c16_i32 = arith.constant 16 : i32
    %31 = vector.broadcast %c16_i32 : i32 to vector<16x128xi32>
    %32 = arith.select %30, %5, %31 : vector<16x128xi1>, vector<16x128xi32>
    %c1_i32_7 = arith.constant 1 : i32
    %33 = tpu.dynamic_rotate %32 by %c1_i32_7 dim 1 : vector<16x128xi32>, i32 -> vector<16x128xi32>
    %c113_i32_8 = arith.constant 113 : i32
    %34 = tpu.dynamic_rotate %32 by %c113_i32_8 dim 1 : vector<16x128xi32>, i32 -> vector<16x128xi32>
    %c1_i32_9 = arith.constant 1 : i32
    %35 = vector.broadcast %c1_i32_9 : i32 to vector<16x128xi32>
    %36 = arith.cmpi slt, %5, %35 : vector<16x128xi32>
    %37 = arith.select %36, %34, %33 : vector<16x128xi1>, vector<16x128xi32>
    %38 = arith.minsi %32, %37 : vector<16x128xi32>
    %c2_i32_10 = arith.constant 2 : i32
    %39 = tpu.dynamic_rotate %38 by %c2_i32_10 dim 1 : vector<16x128xi32>, i32 -> vector<16x128xi32>
    %c114_i32_11 = arith.constant 114 : i32
    %40 = tpu.dynamic_rotate %38 by %c114_i32_11 dim 1 : vector<16x128xi32>, i32 -> vector<16x128xi32>
    %c2_i32_12 = arith.constant 2 : i32
    %41 = vector.broadcast %c2_i32_12 : i32 to vector<16x128xi32>
    %42 = arith.cmpi slt, %5, %41 : vector<16x128xi32>
    %43 = arith.select %42, %40, %39 : vector<16x128xi1>, vector<16x128xi32>
    %44 = arith.minsi %38, %43 : vector<16x128xi32>
    %c4_i32_13 = arith.constant 4 : i32
    %45 = tpu.dynamic_rotate %44 by %c4_i32_13 dim 1 : vector<16x128xi32>, i32 -> vector<16x128xi32>
    %c116_i32_14 = arith.constant 116 : i32
    %46 = tpu.dynamic_rotate %44 by %c116_i32_14 dim 1 : vector<16x128xi32>, i32 -> vector<16x128xi32>
    %c4_i32_15 = arith.constant 4 : i32
    %47 = vector.broadcast %c4_i32_15 : i32 to vector<16x128xi32>
    %48 = arith.cmpi slt, %5, %47 : vector<16x128xi32>
    %49 = arith.select %48, %46, %45 : vector<16x128xi1>, vector<16x128xi32>
    %50 = arith.minsi %44, %49 : vector<16x128xi32>
    %c8_i32_16 = arith.constant 8 : i32
    %51 = tpu.dynamic_rotate %50 by %c8_i32_16 dim 1 : vector<16x128xi32>, i32 -> vector<16x128xi32>
    %c120_i32_17 = arith.constant 120 : i32
    %52 = tpu.dynamic_rotate %50 by %c120_i32_17 dim 1 : vector<16x128xi32>, i32 -> vector<16x128xi32>
    %c8_i32_18 = arith.constant 8 : i32
    %53 = vector.broadcast %c8_i32_18 : i32 to vector<16x128xi32>
    %54 = arith.cmpi slt, %5, %53 : vector<16x128xi32>
    %55 = arith.select %54, %52, %51 : vector<16x128xi1>, vector<16x128xi32>
    %56 = arith.minsi %50, %55 : vector<16x128xi32>
    %57 = arith.cmpi eq, %5, %56 : vector<16x128xi32>
    %c1_i32_19 = arith.constant 1 : i32
    %c0_i32 = arith.constant 0 : i32
    %58 = vector.broadcast %c1_i32_19 : i32 to vector<16x128xi32>
    %59 = vector.broadcast %c0_i32 : i32 to vector<16x128xi32>
    %60 = arith.select %57, %58, %59 : vector<16x128xi1>, vector<16x128xi32>
    %61 = arith.sitofp %60 : vector<16x128xi32> to vector<16x128xf32>
    %c0_20 = arith.constant 0 : index
    %c0_21 = arith.constant 0 : index
    %62 = vector.load %arg4[%c0_20, %c0_21] : memref<128x128xf32, #tpu.memory_space<vmem>>, vector<128x128xf32>
    %cst_22 = arith.constant dense<0.000000e+00> : vector<16x128xf32>
    %63 = tpu.matmul %61, %62, %cst_22 {dimension_numbers = #tpu.dot_dimension_numbers<[1], [0], [0], [1], [0, 0, 1, 1], [], []>} : vector<16x128xf32>, vector<128x128xf32>, vector<16x128xf32> -> vector<16x128xf32>
    %c1 = arith.constant 1 : index
    %c0_23 = arith.constant 0 : index
    %64 = vector.load %arg5[%c1, %c0_23] : memref<2x128xf32, #tpu.memory_space<vmem>>, vector<1x128xf32>
    %65 = vector.broadcast %64 : vector<1x128xf32> to vector<16x128xf32>
    %66 = arith.mulf %63, %65 : vector<16x128xf32>
    %c0_24 = arith.constant 0 : index
    %c0_25 = arith.constant 0 : index
    %67 = vector.load %arg5[%c0_24, %c0_25] : memref<2x128xf32, #tpu.memory_space<vmem>>, vector<1x128xf32>
    %68 = vector.broadcast %67 : vector<1x128xf32> to vector<16x128xf32>
    %69 = arith.addf %66, %68 : vector<16x128xf32>
    %c0_26 = arith.constant 0 : index
    %c0_27 = arith.constant 0 : index
    %70 = vector.load %arg6[%c0_26, %c0_27] : memref<16x128xf32, #tpu.memory_space<vmem>>, vector<16x128xf32>
    tpu.vector_store %arg6[%c0_26, %c0_27], %69 {strides = array<i32>} : memref<16x128xf32, #tpu.memory_space<vmem>>, vector<16x128xf32>,
    return
  }
  func.func @transform_0(%arg0: i32, %arg1: i32) -> (i32, i32) {
    %c0_i32 = arith.constant 0 : i32
    %c0_i32_0 = arith.constant 0 : i32
    return %arg0, %c0_i32 : i32, i32
  }
  func.func @transform_1(%arg0: i32, %arg1: i32) -> (i32, i32) {
    %c0_i32 = arith.constant 0 : i32
    %c0_i32_0 = arith.constant 0 : i32
    %c0_i32_1 = arith.constant 0 : i32
    return %c0_i32, %c0_i32_0 : i32, i32
  }
  func.func @transform_2(%arg0: i32, %arg1: i32) -> (i32, i32) {
    %c0_i32 = arith.constant 0 : i32
    %c0_i32_0 = arith.constant 0 : i32
    return %c0_i32, %arg1 : i32, i32
  }
  func.func @transform_3(%arg0: i32, %arg1: i32) -> (i32, i32) {
    %c0_i32 = arith.constant 0 : i32
    %c0_i32_0 = arith.constant 0 : i32
    return %c0_i32, %arg1 : i32, i32
  }
  func.func @transform_4(%arg0: i32, %arg1: i32) -> (i32, i32) {
    %c0_i32 = arith.constant 0 : i32
    return %arg0, %arg1 : i32, i32
  }
}

module attributes {stable_mosaic.version = 11 : i64} {
  func.func @_amm_linear_kernel(%arg0: i32, %arg1: i32, %arg2: memref<16x32xf32, #tpu.memory_space<vmem>>, %arg3: memref<32x128xf32, #tpu.memory_space<vmem>>, %arg4: memref<128x128xf32, #tpu.memory_space<vmem>>, %arg5: memref<2x128xf32, #tpu.memory_space<vmem>>, %arg6: memref<16x128xf32, #tpu.memory_space<vmem>>) attributes {dimension_semantics = [#tpu.dimension_semantics<parallel>, #tpu.dimension_semantics<parallel>], iteration_bounds = array<i64: 1, 1>, scalar_prefetch = 0 : i64, scratch_operands = 0 : i64, tpu.core_type = #tpu.core_type<tc>, window_params = [{transform_indices = @transform_0, window_bounds = array<i64: 16, 32>}, {pipeline_mode = #tpu.pipeline_mode<synchronous>, transform_indices = @transform_1, window_bounds = array<i64: 32, 128>}, {transform_indices = @transform_2, window_bounds = array<i64: 128, 128>}, {transform_indices = @transform_3, window_bounds = array<i64: 2, 128>}, {transform_indices = @transform_4, window_bounds = array<i64: 16, 128>}]} {
    %c0 = arith.constant 0 : index
    %c0_0 = arith.constant 0 : index
    %0 = vector.load %arg2[%c0, %c0_0] : memref<16x32xf32, #tpu.memory_space<vmem>>, vector<16x32xf32>
    %c0_1 = arith.constant 0 : index
    %c0_2 = arith.constant 0 : index
    %1 = vector.load %arg3[%c0_1, %c0_2] : memref<32x128xf32, #tpu.memory_space<vmem>>, vector<32x128xf32>
    %cst = arith.constant dense<0.000000e+00> : vector<16x128xf32>
    %2 = tpu.matmul %0, %1, %cst {dimension_numbers = #tpu.dot_dimension_numbers<[1], [0], [0], [1], [0, 0, 1, 1], [], []>} : vector<16x32xf32>, vector<32x128xf32>, vector<16x128xf32> -> vector<16x128xf32>
    %3 = tpu.iota {dimensions = array<i32: 1>} : vector<16x128xi32>
    %c15_i32 = arith.constant 15 : i32
    %4 = vector.broadcast %c15_i32 : i32 to vector<16x128xi32>
    %5 = arith.andi %3, %4 : vector<16x128xi32>
    %c1_i32 = arith.constant 1 : i32
    %6 = tpu.dynamic_rotate %2 by %c1_i32 dim 1 : vector<16x128xf32>, i32 -> vector<16x128xf32>
    %c113_i32 = arith.constant 113 : i32
    %7 = tpu.dynamic_rotate %2 by %c113_i32 dim 1 : vector<16x128xf32>, i32 -> vector<16x128xf32>
    %c1_i32_3 = arith.constant 1 : i32
    %8 = vector.broadcast %c1_i32_3 : i32 to vector<16x128xi32>
    %9 = arith.cmpi slt, %5, %8 : vector<16x128xi32>
    %10 = arith.select %9, %7, %6 : vector<16x128xi1>, vector<16x128xf32>
    %11 = arith.maximumf %2, %10 : vector<16x128xf32>
    %c2_i32 = arith.constant 2 : i32
    %12 = tpu.dynamic_rotate %11 by %c2_i32 dim 1 : vector<16x128xf32>, i32 -> vector<16x128xf32>
    %c114_i32 = arith.constant 114 : i32
    %13 = tpu.dynamic_rotate %11 by %c114_i32 dim 1 : vector<16x128xf32>, i32 -> vector<16x128xf32>
    %c2_i32_4 = arith.constant 2 : i32
    %14 = vector.broadcast %c2_i32_4 : i32 to vector<16x128xi32>
    %15 = arith.cmpi slt, %5, %14 : vector<16x128xi32>
    %16 = arith.select %15, %13, %12 : vector<16x128xi1>, vector<16x128xf32>
    %17 = arith.maximumf %11, %16 : vector<16x128xf32>
    %c4_i32 = arith.constant 4 : i32
    %18 = tpu.dynamic_rotate %17 by %c4_i32 dim 1 : vector<16x128xf32>, i32 -> vector<16x128xf32>
    %c116_i32 = arith.constant 116 : i32
    %19 = tpu.dynamic_rotate %17 by %c116_i32 dim 1 : vector<16x128xf32>, i32 -> vector<16x128xf32>
    %c4_i32_5 = arith.constant 4 : i32
    %20 = vector.broadcast %c4_i32_5 : i32 to vector<16x128xi32>
    %21 = arith.cmpi slt, %5, %20 : vector<16x128xi32>
    %22 = arith.select %21, %19, %18 : vector<16x128xi1>, vector<16x128xf32>
    %23 = arith.maximumf %17, %22 : vector<16x128xf32>
    %c8_i32 = arith.constant 8 : i32
    %24 = tpu.dynamic_rotate %23 by %c8_i32 dim 1 : vector<16x128xf32>, i32 -> vector<16x128xf32>
    %c120_i32 = arith.constant 120 : i32
    %25 = tpu.dynamic_rotate %23 by %c120_i32 dim 1 : vector<16x128xf32>, i32 -> vector<16x128xf32>
    %c8_i32_6 = arith.constant 8 : i32
    %26 = vector.broadcast %c8_i32_6 : i32 to vector<16x128xi32>
    %27 = arith.cmpi slt, %5, %26 : vector<16x128xi32>
    %28 = arith.select %27, %25, %24 : vector<16x128xi1>, vector<16x128xf32>
    %29 = arith.maximumf %23, %28 : vector<16x128xf32>
    %30 = arith.cmpf oeq, %2, %29 : vector<16x128xf32>
    %c16_i32 = arith.constant 16 : i32
    %31 = vector.broadcast %c16_i32 : i32 to vector<16x128xi32>
    %32 = arith.select %30, %5, %31 : vector<16x128xi1>, vector<16x128xi32>
    %c1_i32_7 = arith.constant 1 : i32
    %33 = tpu.dynamic_rotate %32 by %c1_i32_7 dim 1 : vector<16x128xi32>, i32 -> vector<16x128xi32>
    %c113_i32_8 = arith.constant 113 : i32
    %34 = tpu.dynamic_rotate %32 by %c113_i32_8 dim 1 : vector<16x128xi32>, i32 -> vector<16x128xi32>
    %c1_i32_9 = arith.constant 1 : i32
    %35 = vector.broadcast %c1_i32_9 : i32 to vector<16x128xi32>
    %36 = arith.cmpi slt, %5, %35 : vector<16x128xi32>
    %37 = arith.select %36, %34, %33 : vector<16x128xi1>, vector<16x128xi32>
    %38 = arith.minsi %32, %37 : vector<16x128xi32>
    %c2_i32_10 = arith.constant 2 : i32
    %39 = tpu.dynamic_rotate %38 by %c2_i32_10 dim 1 : vector<16x128xi32>, i32 -> vector<16x128xi32>
    %c114_i32_11 = arith.constant 114 : i32
    %40 = tpu.dynamic_rotate %38 by %c114_i32_11 dim 1 : vector<16x128xi32>, i32 -> vector<16x128xi32>
    %c2_i32_12 = arith.constant 2 : i32
    %41 = vector.broadcast %c2_i32_12 : i32 to vector<16x128xi32>
    %42 = arith.cmpi slt, %5, %41 : vector<16x128xi32>
    %43 = arith.select %42, %40, %39 : vector<16x128xi1>, vector<16x128xi32>
    %44 = arith.minsi %38, %43 : vector<16x128xi32>
    %c4_i32_13 = arith.constant 4 : i32
    %45 = tpu.dynamic_rotate %44 by %c4_i32_13 dim 1 : vector<16x128xi32>, i32 -> vector<16x128xi32>
    %c116_i32_14 = arith.constant 116 : i32
    %46 = tpu.dynamic_rotate %44 by %c116_i32_14 dim 1 : vector<16x128xi32>, i32 -> vector<16x128xi32>
    %c4_i32_15 = arith.constant 4 : i32
    %47 = vector.broadcast %c4_i32_15 : i32 to vector<16x128xi32>
    %48 = arith.cmpi slt, %5, %47 : vector<16x128xi32>
    %49 = arith.select %48, %46, %45 : vector<16x128xi1>, vector<16x128xi32>
    %50 = arith.minsi %44, %49 : vector<16x128xi32>
    %c8_i32_16 = arith.constant 8 : i32
    %51 = tpu.dynamic_rotate %50 by %c8_i32_16 dim 1 : vector<16x128xi32>, i32 -> vector<16x128xi32>
    %c120_i32_17 = arith.constant 120 : i32
    %52 = tpu.dynamic_rotate %50 by %c120_i32_17 dim 1 : vector<16x128xi32>, i32 -> vector<16x128xi32>
    %c8_i32_18 = arith.constant 8 : i32
    %53 = vector.broadcast %c8_i32_18 : i32 to vector<16x128xi32>
    %54 = arith.cmpi slt, %5, %53 : vector<16x128xi32>
    %55 = arith.select %54, %52, %51 : vector<16x128xi1>, vector<16x128xi32>
    %56 = arith.minsi %50, %55 : vector<16x128xi32>
    %57 = arith.cmpi eq, %5, %56 : vector<16x128xi32>
    %c1_i32_19 = arith.constant 1 : i32
    %c0_i32 = arith.constant 0 : i32
    %58 = vector.broadcast %c1_i32_19 : i32 to vector<16x128xi32>
    %59 = vector.broadcast %c0_i32 : i32 to vector<16x128xi32>
    %60 = arith.select %57, %58, %59 : vector<16x128xi1>, vector<16x128xi32>
    %61 = arith.sitofp %60 : vector<16x128xi32> to vector<16x128xf32>
    %c0_20 = arith.constant 0 : index
    %c0_21 = arith.constant 0 : index
    %62 = vector.load %arg4[%c0_20, %c0_21] : memref<128x128xf32, #tpu.memory_space<vmem>>, vector<128x128xf32>
    %cst_22 = arith.constant dense<0.000000e+00> : vector<16x128xf32>
    %63 = tpu.matmul %61, %62, %cst_22 {dimension_numbers = #tpu.dot_dimension_numbers<[1], [0], [0], [1], [0, 0, 1, 1], [], []>} : vector<16x128xf32>, vector<128x128xf32>, vector<16x128xf32> -> vector<16x128xf32>
    %c1 = arith.constant 1 : index
    %c0_23 = arith.constant 0 : index
    %64 = vector.load %arg5[%c1, %c0_23] : memref<2x128xf32, #tpu.memory_space<vmem>>, vector<1x128xf32>
    %65 = vector.broadcast %64 : vector<1x128xf32> to vector<16x128xf32>
    %66 = arith.mulf %63, %65 : vector<16x128xf32>
    %c0_24 = arith.constant 0 : index
    %c0_25 = arith.constant 0 : index
    %67 = vector.load %arg5[%c0_24, %c0_25] : memref<2x128xf32, #tpu.memory_space<vmem>>, vector<1x128xf32>
    %68 = vector.broadcast %67 : vector<1x128xf32> to vector<16x128xf32>
    %69 = arith.addf %66, %68 : vector<16x128xf32>
    %c0_26 = arith.constant 0 : index
    %c0_27 = arith.constant 0 : index
    %70 = vector.load %arg6[%c0_26, %c0_27] : memref<16x128xf32, #tpu.memory_space<vmem>>, vector<16x128xf32>
    tpu.vector_store %arg6[%c0_26, %c0_27], %69 {strides = array<i32>} : memref<16x128xf32, #tpu.memory_space<vmem>>, vector<16x128xf32>,
    return
  }
  func.func @transform_0(%arg0: i32, %arg1: i32) -> (i32, i32) {
    %c0_i32 = arith.constant 0 : i32
    %c0_i32_0 = arith.constant 0 : i32
    return %arg0, %c0_i32 : i32, i32
  }
  func.func @transform_1(%arg0: i32, %arg1: i32) -> (i32, i32) {
    %c0_i32 = arith.constant 0 : i32
    %c0_i32_0 = arith.constant 0 : i32
    %c0_i32_1 = arith.constant 0 : i32
    return %c0_i32, %c0_i32_0 : i32, i32
  }
  func.func @transform_2(%arg0: i32, %arg1: i32) -> (i32, i32) {
    %c0_i32 = arith.constant 0 : i32
    %c0_i32_0 = arith.constant 0 : i32
    return %c0_i32, %arg1 : i32, i32
  }
  func.func @transform_3(%arg0: i32, %arg1: i32) -> (i32, i32) {
    %c0_i32 = arith.constant 0 : i32
    %c0_i32_0 = arith.constant 0 : i32
    return %c0_i32, %arg1 : i32, i32
  }
  func.func @transform_4(%arg0: i32, %arg1: i32) -> (i32, i32) {
    %c0_i32 = arith.constant 0 : i32
    return %arg0, %arg1 : i32, i32
  }
}

</mosaic_0001>

<llo_original>
// kernel: amm_linear_forward.1
$region0: #{amm_linear_forward.1}
  #allocation0 [shape = 'u32[]', space=smem, size = 0x4, offset = 0x4, fixed_abs, tag = 'smem constant byte address 0x4 - core index']
  #allocation1 [shape = 'u32[144,128]{1,0:T(1,128)}', space=vmem, size = 0x12000, scoped, tag = 'internal scratch']
  %s0 = inlined_call_operand.vmem [shape: f32[16,32], index: 0, kind: input, shape index: {}]
  %s1 = inlined_call_operand.vmem [shape: f32[32,128], index: 1, kind: input, shape index: {}]
  %s2 = inlined_call_operand.vmem [shape: f32[128,128], index: 2, kind: input, shape index: {}]
  %s3 = inlined_call_operand.vmem [shape: f32[2,128], index: 3, kind: input, shape index: {}]
  %s4 = inlined_call_operand.vmem [shape: f32[16,128], index: 4, kind: output, shape index: {}]
  %s5 = sld [smem:[#allocation0]]
  $region26: #{amm_linear_forward.1} parent=0
    _
  %s7 = ssub.s32 1, %s5
  %s8 = scalar_select 0, %s7, %s5
  // Predicated region
  $region2: #{amm_linear_forward.1} parent=0 // pred_check
    _
  $region3: #{amm_linear_forward.1} parent=0 // pred_check_branch
    %10 = sbr.rel (0) target = $region5
  $region4: #{amm_linear_forward.1} parent=0 // pred_region
    _
  $region5: #{amm_linear_forward.1} parent=0 // pred_fallthru
    _
  // Predicated region
  $region6: #{amm_linear_forward.1} parent=0 // pred_check
    _
  $region7: #{amm_linear_forward.1} parent=0 // pred_check_branch
    %12 = sbr.rel (0) target = $region9
  $region8: #{amm_linear_forward.1} parent=0 // pred_region
    _
  $region9: #{amm_linear_forward.1} parent=0 // pred_fallthru
    _
  // Predicated region
  $region10: #{amm_linear_forward.1} parent=0 // pred_check
    _
  $region11: #{amm_linear_forward.1} parent=0 // pred_check_branch
    %14 = sbr.rel (0) target = $region13
  $region12: #{amm_linear_forward.1} parent=0 // pred_region
    _
  $region13: #{amm_linear_forward.1} parent=0 // pred_fallthru
    _
  // Predicated region
  $region14: #{amm_linear_forward.1} parent=0 // pred_check
    _
  $region15: #{amm_linear_forward.1} parent=0 // pred_check_branch
    %16 = sbr.rel (0) target = $region17
  $region16: #{amm_linear_forward.1} parent=0 // pred_region
    _
  $region17: #{amm_linear_forward.1} parent=0 // pred_fallthru
    _
  %v17 = vld [vmem:[%s0] sm:$0xff]
  %v18 = vld [vmem:[%s0 + $0x8] sm:$0xff]
  %v19 = vld [vmem:[%s1] sm:$0xff]
  %v20 = vld [vmem:[%s1 + $0x8] sm:$0xff]
  %v21 = vld [vmem:[%s1 + $0x10] sm:$0xff]
  %v22 = vld [vmem:[%s1 + $0x18] sm:$0xff]
  %vm23 = vcmask 261120
  %v25 = vsel %vm23, %v17, 0
  %v28 = vsel %vm23, %v18, 0
  %30 = vmatprep.subr.mxu0 0.0
  %31 = vmatpush1.msra.mxu0 0.0
  %32 = vmatprep.subr.mxu0 0.0
  %33 = vmatpush1.msra.mxu0 0.0
  %34 = vmatprep.subr.mxu0 0.0
  %35 = vmatpush1.msra.mxu0 0.0
  %36 = vmatprep.subr.mxu0 0.0
  %37 = vmatpush1.msra.mxu0 0.0
  %38 = vmatprep.subr.mxu0 0.0
  %39 = vmatpush1.msra.mxu0 0.0
  %40 = vmatprep.subr.mxu0 0.0
  %41 = vmatpush1.msra.mxu0 0.0
  %42 = vmatprep.subr.mxu0 0.0
  %43 = vmatpush1.msra.mxu0 0.0
  %44 = vmatprep.subr.mxu0 0.0
  %45 = vmatpush1.msra.mxu0 0.0
  %46 = vmatprep.subr.mxu0 0.0
  %47 = vmatpush1.msra.mxu0 0.0
  %48 = vmatprep.subr.mxu0 0.0
  %49 = vmatpush1.msra.mxu0 0.0
  %50 = vmatprep.subr.mxu0 0.0
  %51 = vmatpush1.msra.mxu0 0.0
  %52 = vmatprep.subr.mxu0 0.0
  %53 = vmatpush1.msra.mxu0 0.0
  %54 = vmatprep.subr.mxu0 0.0
  %55 = vmatpush1.msra.mxu0 %v22
  %56 = vmatprep.subr.mxu0 0.0
  %57 = vmatpush1.msra.mxu0 %v21
  %58 = vmatprep.subr.mxu0 0.0
  %59 = vmatpush1.msra.mxu0 %v20
  %60 = vmatprep.subr.mxu0 0.0
  %61 = vmatpush1.msra.mxu0 %v19
  %62 = vmatprep.subr.mxu0 0.0
  %63 = vmatpush2.msra.mxu0 0.0
  %64 = vmatprep.subr.mxu0 0.0
  %65 = vmatpush2.msra.mxu0 0.0
  %66 = vmatprep.subr.mxu0 0.0
  %67 = vmatpush2.msra.mxu0 0.0
  %68 = vmatprep.subr.mxu0 0.0
  %69 = vmatpush2.msra.mxu0 0.0
  %70 = vmatprep.subr.mxu0 0.0
  %71 = vmatpush2.msra.mxu0 0.0
  %72 = vmatprep.subr.mxu0 0.0
  %73 = vmatpush2.msra.mxu0 0.0
  %74 = vmatprep.subr.mxu0 0.0
  %75 = vmatpush2.msra.mxu0 0.0
  %76 = vmatprep.subr.mxu0 0.0
  %77 = vmatpush2.msra.mxu0 0.0
  %78 = vmatprep.subr.mxu0 0.0
  %79 = vmatpush2.msra.mxu0 0.0
  %80 = vmatprep.subr.mxu0 0.0
  %81 = vmatpush2.msra.mxu0 0.0
  %82 = vmatprep.subr.mxu0 0.0
  %83 = vmatpush2.msra.mxu0 0.0
  %84 = vmatprep.subr.mxu0 0.0
  %85 = vmatpush2.msra.mxu0 0.0
  %86 = vmatprep.subr.mxu0 0.0
  %87 = vmatpush2.msra.mxu0 0.0
  %88 = vmatprep.subr.mxu0 0.0
  %89 = vmatpush2.msra.mxu0 0.0
  %90 = vmatprep.subr.mxu0 0.0
  %91 = vmatpush2.msra.mxu0 0.0
  %92 = vmatprep.subr.mxu0 0.0
  %93 = vmatpush2.msra.mxu0 0.0
  %94 = vmatprep.mubr.f32.mxu0 0.0
  %95 = vmatmul.mubr.f32.gmra.mxu0 %v25
  %v96 = vpop.f32.mrf.mxu0
  %v97 = vadd.f32 0.0, %v96
  %v98 = vpop.f32.mrf.mxu0
  %99 = vmatprep.mubr.f32.mxu0 0.0
  %100 = vmatmul.mubr.f32.gmra.mxu0 %v28
  %v101 = vpop.f32.mrf.mxu0
  %v102 = vadd.f32 0.0, %v101
  %v103 = vpop.f32.mrf.mxu0
  %104 = vdwg.mxu0
  %v105 = vlaneseq
  %v106 = vand.u32 %v105, 127
  %v107 = vand.u32 %v106, 15
  %108 = vrot.lane.b32.xlu0 %v97, 1
  %v109 = vpop.permute.xlu0 %108
  %110 = vrot.lane.b32.xlu0 %v102, 1
  %v111 = vpop.permute.xlu0 %110
  %112 = vrot.lane.b32.xlu0 %v97, 113
  %v113 = vpop.permute.xlu0 %112
  %114 = vrot.lane.b32.xlu0 %v102, 113
  %v115 = vpop.permute.xlu0 %114
  %vm116 = vcmp.lt.s32.totalorder %v107, 1
  %v117 = vsel %vm116, %v113, %v109
  %v118 = vsel %vm116, %v115, %v111
  %v119 = vmax.f32 %v97, %v117
  %v120 = vmax.f32 %v102, %v118
  %121 = vrot.lane.b32.xlu0 %v119, 2
  %v122 = vpop.permute.xlu0 %121
  %123 = vrot.lane.b32.xlu0 %v120, 2
  %v124 = vpop.permute.xlu0 %123
  %125 = vrot.lane.b32.xlu0 %v119, 114
  %v126 = vpop.permute.xlu0 %125
  %127 = vrot.lane.b32.xlu0 %v120, 114
  %v128 = vpop.permute.xlu0 %127
  %vm129 = vcmp.lt.s32.totalorder %v107, 2
  %v130 = vsel %vm129, %v126, %v122
  %v131 = vsel %vm129, %v128, %v124
  %v132 = vmax.f32 %v119, %v130
  %v133 = vmax.f32 %v120, %v131
  %134 = vrot.lane.b32.xlu0 %v132, 4
  %v135 = vpop.permute.xlu0 %134
  %136 = vrot.lane.b32.xlu0 %v133, 4
  %v137 = vpop.permute.xlu0 %136
  %138 = vrot.lane.b32.xlu0 %v132, 116
  %v139 = vpop.permute.xlu0 %138
  %140 = vrot.lane.b32.xlu0 %v133, 116
  %v141 = vpop.permute.xlu0 %140
  %vm142 = vcmp.lt.s32.totalorder %v107, 4
  %v143 = vsel %vm142, %v139, %v135
  %v144 = vsel %vm142, %v141, %v137
  %v145 = vmax.f32 %v132, %v143
  %v146 = vmax.f32 %v133, %v144
  %147 = vrot.lane.b32.xlu0 %v145, 8
  %v148 = vpop.permute.xlu0 %147
  %149 = vrot.lane.b32.xlu0 %v146, 8
  %v150 = vpop.permute.xlu0 %149
  %151 = vrot.lane.b32.xlu0 %v145, 120
  %v152 = vpop.permute.xlu0 %151
  %153 = vrot.lane.b32.xlu0 %v146, 120
  %v154 = vpop.permute.xlu0 %153
  %vm155 = vcmp.lt.s32.totalorder %v107, 8
  %v156 = vsel %vm155, %v152, %v148
  %v157 = vsel %vm155, %v154, %v150
  %v158 = vmax.f32 %v145, %v156
  %v159 = vmax.f32 %v146, %v157
  %vm160 = vcmp.eq.f32.partialorder %v97, %v158
  %vm161 = vcmp.eq.f32.partialorder %v102, %v159
  %v162 = vsel %vm160, %v107, 16
  %v163 = vsel %vm161, %v107, 16
  %164 = vrot.lane.b32.xlu0 %v162, 1
  %v165 = vpop.permute.xlu0 %164
  %166 = vrot.lane.b32.xlu0 %v163, 1
  %v167 = vpop.permute.xlu0 %166
  %168 = vrot.lane.b32.xlu0 %v162, 113
  %v169 = vpop.permute.xlu0 %168
  %170 = vrot.lane.b32.xlu0 %v163, 113
  %v171 = vpop.permute.xlu0 %170
  %v172 = vsel %vm116, %v169, %v165
  %v173 = vsel %vm116, %v171, %v167
  %vm174 = vcmp.lt.s32.totalorder %v162, %v172
  %v175 = vsel %vm174, %v162, %v172
  %vm176 = vcmp.lt.s32.totalorder %v163, %v173
  %v177 = vsel %vm176, %v163, %v173
  %178 = vrot.lane.b32.xlu0 %v175, 2
  %v179 = vpop.permute.xlu0 %178
  %180 = vrot.lane.b32.xlu0 %v177, 2
  %v181 = vpop.permute.xlu0 %180
  %182 = vrot.lane.b32.xlu0 %v175, 114
  %v183 = vpop.permute.xlu0 %182
  %184 = vrot.lane.b32.xlu0 %v177, 114
  %v185 = vpop.permute.xlu0 %184
  %v186 = vsel %vm129, %v183, %v179
  %v187 = vsel %vm129, %v185, %v181
  %vm188 = vcmp.lt.s32.totalorder %v175, %v186
  %v189 = vsel %vm188, %v175, %v186
  %vm190 = vcmp.lt.s32.totalorder %v177, %v187
  %v191 = vsel %vm190, %v177, %v187
  %192 = vrot.lane.b32.xlu0 %v189, 4
  %v193 = vpop.permute.xlu0 %192
  %194 = vrot.lane.b32.xlu0 %v191, 4
  %v195 = vpop.permute.xlu0 %194
  %196 = vrot.lane.b32.xlu0 %v189, 116
  %v197 = vpop.permute.xlu0 %196
  %198 = vrot.lane.b32.xlu0 %v191, 116
  %v199 = vpop.permute.xlu0 %198
  %v200 = vsel %vm142, %v197, %v193
  %v201 = vsel %vm142, %v199, %v195
  %vm202 = vcmp.lt.s32.totalorder %v189, %v200
  %v203 = vsel %vm202, %v189, %v200
  %vm204 = vcmp.lt.s32.totalorder %v191, %v201
  %v205 = vsel %vm204, %v191, %v201
  %206 = vrot.lane.b32.xlu0 %v203, 8
  %v207 = vpop.permute.xlu0 %206
  %208 = vrot.lane.b32.xlu0 %v205, 8
  %v209 = vpop.permute.xlu0 %208
  %210 = vrot.lane.b32.xlu0 %v203, 120
  %v211 = vpop.permute.xlu0 %210
  %212 = vrot.lane.b32.xlu0 %v205, 120
  %v213 = vpop.permute.xlu0 %212
  %v214 = vsel %vm155, %v211, %v207
  %v215 = vsel %vm155, %v213, %v209
  %vm216 = vcmp.lt.s32.totalorder %v203, %v214
  %v217 = vsel %vm216, %v203, %v214
  %vm218 = vcmp.lt.s32.totalorder %v205, %v215
  %v219 = vsel %vm218, %v205, %v215
  %vm220 = vcmp.eq.s32.totalorder %v107, %v217
  %vm221 = vcmp.eq.s32.totalorder %v107, %v219
  %v222 = vsel %vm220, 1, 0
  %v223 = vsel %vm221, 1, 0
  %v224 = vcvt.s32.f32 %v222
  %v225 = vcvt.s32.f32 %v223
  %v226 = vld [vmem:[%s2] sm:$0xff]
  %v227 = vld [vmem:[%s2 + $0x8] sm:$0xff]
  %v228 = vld [vmem:[%s2 + $0x10] sm:$0xff]
  %v229 = vld [vmem:[%s2 + $0x18] sm:$0xff]
  %v230 = vld [vmem:[%s2 + $0x20] sm:$0xff]
  %v231 = vld [vmem:[%s2 + $0x28] sm:$0xff]
  %v232 = vld [vmem:[%s2 + $0x30] sm:$0xff]
  %v233 = vld [vmem:[%s2 + $0x38] sm:$0xff]
  %v234 = vld [vmem:[%s2 + $0x40] sm:$0xff]
  %v235 = vld [vmem:[%s2 + $0x48] sm:$0xff]
  %v236 = vld [vmem:[%s2 + $0x50] sm:$0xff]
  %v237 = vld [vmem:[%s2 + $0x58] sm:$0xff]
  %v238 = vld [vmem:[%s2 + $0x60] sm:$0xff]
  %v239 = vld [vmem:[%s2 + $0x68] sm:$0xff]
  %v240 = vld [vmem:[%s2 + $0x70] sm:$0xff]
  %v241 = vld [vmem:[%s2 + $0x78] sm:$0xff]
  %242 = vmatprep.subr.mxu0 0.0
  %243 = vmatpush1.msra.mxu0 %v241
  %244 = vmatprep.subr.mxu0 0.0
  %245 = vmatpush1.msra.mxu0 %v240
  %246 = vmatprep.subr.mxu0 0.0
  %247 = vmatpush1.msra.mxu0 %v239
  %248 = vmatprep.subr.mxu0 0.0
  %249 = vmatpush1.msra.mxu0 %v238
  %250 = vmatprep.subr.mxu0 0.0
  %251 = vmatpush1.msra.mxu0 %v237
  %252 = vmatprep.subr.mxu0 0.0
  %253 = vmatpush1.msra.mxu0 %v236
  %254 = vmatprep.subr.mxu0 0.0
  %255 = vmatpush1.msra.mxu0 %v235
  %256 = vmatprep.subr.mxu0 0.0
  %257 = vmatpush1.msra.mxu0 %v234
  %258 = vmatprep.subr.mxu0 0.0
  %259 = vmatpush1.msra.mxu0 %v233
  %260 = vmatprep.subr.mxu0 0.0
  %261 = vmatpush1.msra.mxu0 %v232
  %262 = vmatprep.subr.mxu0 0.0
  %263 = vmatpush1.msra.mxu0 %v231
  %264 = vmatprep.subr.mxu0 0.0
  %265 = vmatpush1.msra.mxu0 %v230
  %266 = vmatprep.subr.mxu0 0.0
  %267 = vmatpush1.msra.mxu0 %v229
  %268 = vmatprep.subr.mxu0 0.0
  %269 = vmatpush1.msra.mxu0 %v228
  %270 = vmatprep.subr.mxu0 0.0
  %271 = vmatpush1.msra.mxu0 %v227
  %272 = vmatprep.subr.mxu0 0.0
  %273 = vmatpush1.msra.mxu0 %v226
  %274 = vmatprep.subr.mxu0 0.0
  %275 = vmatpush2.msra.mxu0 0.0
  %276 = vmatprep.subr.mxu0 0.0
  %277 = vmatpush2.msra.mxu0 0.0
  %278 = vmatprep.subr.mxu0 0.0
  %279 = vmatpush2.msra.mxu0 0.0
  %280 = vmatprep.subr.mxu0 0.0
  %281 = vmatpush2.msra.mxu0 0.0
  %282 = vmatprep.subr.mxu0 0.0
  %283 = vmatpush2.msra.mxu0 0.0
  %284 = vmatprep.subr.mxu0 0.0
  %285 = vmatpush2.msra.mxu0 0.0
  %286 = vmatprep.subr.mxu0 0.0
  %287 = vmatpush2.msra.mxu0 0.0
  %288 = vmatprep.subr.mxu0 0.0
  %289 = vmatpush2.msra.mxu0 0.0
  %290 = vmatprep.subr.mxu0 0.0
  %291 = vmatpush2.msra.mxu0 0.0
  %292 = vmatprep.subr.mxu0 0.0
  %293 = vmatpush2.msra.mxu0 0.0
  %294 = vmatprep.subr.mxu0 0.0
  %295 = vmatpush2.msra.mxu0 0.0
  %296 = vmatprep.subr.mxu0 0.0
  %297 = vmatpush2.msra.mxu0 0.0
  %298 = vmatprep.subr.mxu0 0.0
  %299 = vmatpush2.msra.mxu0 0.0
  %300 = vmatprep.subr.mxu0 0.0
  %301 = vmatpush2.msra.mxu0 0.0
  %302 = vmatprep.subr.mxu0 0.0
  %303 = vmatpush2.msra.mxu0 0.0
  %304 = vmatprep.subr.mxu0 0.0
  %305 = vmatpush2.msra.mxu0 0.0
  %306 = vmatprep.mubr.f32.mxu0 0.0
  %307 = vmatmul.mubr.f32.gmra.mxu0 %v224
  %v308 = vpop.f32.mrf.mxu0
  %v309 = vadd.f32 0.0, %v308
  %v310 = vpop.f32.mrf.mxu0
  %311 = vmatprep.mubr.f32.mxu0 0.0
  %312 = vmatmul.mubr.f32.gmra.mxu0 %v225
  %v313 = vpop.f32.mrf.mxu0
  %v314 = vadd.f32 0.0, %v313
  %v315 = vpop.f32.mrf.mxu0
  %316 = vdwg.mxu0
  %v317 = vld [vmem:[%s3 + $0x1] sm:$0x1]
  %v318 = vlaneseq
  %v319 = vshrl.u32 %v318, 7
  %v320 = vsub.s32 0, %v319
  %v321 = vrot.slane %v317, %v320
  %v322 = vmul.f32 %v309, %v321
  %v323 = vmul.f32 %v314, %v321
  %v324 = vld [vmem:[%s3] sm:$0x1]
  %v325 = vlaneseq
  %v326 = vshrl.u32 %v325, 7
  %v327 = vsub.s32 0, %v326
  %v328 = vrot.slane %v324, %v327
  %v329 = vadd.f32 %v322, %v328
  %v330 = vadd.f32 %v323, %v328
  %331 = vst [vmem:[%s4] sm:$0xff] %v329
  %332 = vst [vmem:[%s4 + $0x8] sm:$0xff] %v330
  // Predicated region
  $region18: #{amm_linear_forward.1} parent=0 // pred_check
    _
  $region19: #{amm_linear_forward.1} parent=0 // pred_check_branch
    %334 = sbr.rel (0) target = $region21
  $region20: #{amm_linear_forward.1} parent=0 // pred_region
    _
  $region21: #{amm_linear_forward.1} parent=0 // pred_fallthru
    _
  // Predicated region
  $region22: #{amm_linear_forward.1} parent=0 // pred_check
    _
  $region23: #{amm_linear_forward.1} parent=0 // pred_check_branch
    %336 = sbr.rel (0) target = $region25
  $region24: #{amm_linear_forward.1} parent=0 // pred_region
    _
  $region25: #{amm_linear_forward.1} parent=0 // pred_fallthru
    _

// kernel: amm_linear_forward.1
$region0: #{amm_linear_forward.1}
  #allocation0 [shape = 'u32[]', space=smem, size = 0x4, offset = 0x4, fixed_abs, tag = 'smem constant byte address 0x4 - core index']
  #allocation1 [shape = 'u32[144,128]{1,0:T(1,128)}', space=vmem, size = 0x12000, scoped, tag = 'internal scratch']
  %s0 = inlined_call_operand.vmem [shape: f32[16,32], index: 0, kind: input, shape index: {}]
  %s1 = inlined_call_operand.vmem [shape: f32[32,128], index: 1, kind: input, shape index: {}]
  %s2 = inlined_call_operand.vmem [shape: f32[128,128], index: 2, kind: input, shape index: {}]
  %s3 = inlined_call_operand.vmem [shape: f32[2,128], index: 3, kind: input, shape index: {}]
  %s4 = inlined_call_operand.vmem [shape: f32[16,128], index: 4, kind: output, shape index: {}]
  %s5 = sld [smem:[#allocation0]]
  $region26: #{amm_linear_forward.1} parent=0
    _
  %s7 = ssub.s32 1, %s5
  %s8 = scalar_select 0, %s7, %s5
  // Predicated region
  $region2: #{amm_linear_forward.1} parent=0 // pred_check
    _
  $region3: #{amm_linear_forward.1} parent=0 // pred_check_branch
    %10 = sbr.rel (0) target = $region5
  $region4: #{amm_linear_forward.1} parent=0 // pred_region
    _
  $region5: #{amm_linear_forward.1} parent=0 // pred_fallthru
    _
  // Predicated region
  $region6: #{amm_linear_forward.1} parent=0 // pred_check
    _
  $region7: #{amm_linear_forward.1} parent=0 // pred_check_branch
    %12 = sbr.rel (0) target = $region9
  $region8: #{amm_linear_forward.1} parent=0 // pred_region
    _
  $region9: #{amm_linear_forward.1} parent=0 // pred_fallthru
    _
  // Predicated region
  $region10: #{amm_linear_forward.1} parent=0 // pred_check
    _
  $region11: #{amm_linear_forward.1} parent=0 // pred_check_branch
    %14 = sbr.rel (0) target = $region13
  $region12: #{amm_linear_forward.1} parent=0 // pred_region
    _
  $region13: #{amm_linear_forward.1} parent=0 // pred_fallthru
    _
  // Predicated region
  $region14: #{amm_linear_forward.1} parent=0 // pred_check
    _
  $region15: #{amm_linear_forward.1} parent=0 // pred_check_branch
    %16 = sbr.rel (0) target = $region17
  $region16: #{amm_linear_forward.1} parent=0 // pred_region
    _
  $region17: #{amm_linear_forward.1} parent=0 // pred_fallthru
    _
  %v17 = vld [vmem:[%s0] sm:$0xff]
  %v18 = vld [vmem:[%s0 + $0x8] sm:$0xff]
  %v19 = vld [vmem:[%s1] sm:$0xff]
  %v20 = vld [vmem:[%s1 + $0x8] sm:$0xff]
  %v21 = vld [vmem:[%s1 + $0x10] sm:$0xff]
  %v22 = vld [vmem:[%s1 + $0x18] sm:$0xff]
  %vm23 = vcmask 261120
  %v25 = vsel %vm23, %v17, 0
  %v28 = vsel %vm23, %v18, 0
  %30 = vmatprep.subr.mxu0 0.0
  %31 = vmatpush1.msra.mxu0 0.0
  %32 = vmatprep.subr.mxu0 0.0
  %33 = vmatpush1.msra.mxu0 0.0
  %34 = vmatprep.subr.mxu0 0.0
  %35 = vmatpush1.msra.mxu0 0.0
  %36 = vmatprep.subr.mxu0 0.0
  %37 = vmatpush1.msra.mxu0 0.0
  %38 = vmatprep.subr.mxu0 0.0
  %39 = vmatpush1.msra.mxu0 0.0
  %40 = vmatprep.subr.mxu0 0.0
  %41 = vmatpush1.msra.mxu0 0.0
  %42 = vmatprep.subr.mxu0 0.0
  %43 = vmatpush1.msra.mxu0 0.0
  %44 = vmatprep.subr.mxu0 0.0
  %45 = vmatpush1.msra.mxu0 0.0
  %46 = vmatprep.subr.mxu0 0.0
  %47 = vmatpush1.msra.mxu0 0.0
  %48 = vmatprep.subr.mxu0 0.0
  %49 = vmatpush1.msra.mxu0 0.0
  %50 = vmatprep.subr.mxu0 0.0
  %51 = vmatpush1.msra.mxu0 0.0
  %52 = vmatprep.subr.mxu0 0.0
  %53 = vmatpush1.msra.mxu0 0.0
  %54 = vmatprep.subr.mxu0 0.0
  %55 = vmatpush1.msra.mxu0 %v22
  %56 = vmatprep.subr.mxu0 0.0
  %57 = vmatpush1.msra.mxu0 %v21
  %58 = vmatprep.subr.mxu0 0.0
  %59 = vmatpush1.msra.mxu0 %v20
  %60 = vmatprep.subr.mxu0 0.0
  %61 = vmatpush1.msra.mxu0 %v19
  %62 = vmatprep.subr.mxu0 0.0
  %63 = vmatpush2.msra.mxu0 0.0
  %64 = vmatprep.subr.mxu0 0.0
  %65 = vmatpush2.msra.mxu0 0.0
  %66 = vmatprep.subr.mxu0 0.0
  %67 = vmatpush2.msra.mxu0 0.0
  %68 = vmatprep.subr.mxu0 0.0
  %69 = vmatpush2.msra.mxu0 0.0
  %70 = vmatprep.subr.mxu0 0.0
  %71 = vmatpush2.msra.mxu0 0.0
  %72 = vmatprep.subr.mxu0 0.0
  %73 = vmatpush2.msra.mxu0 0.0
  %74 = vmatprep.subr.mxu0 0.0
  %75 = vmatpush2.msra.mxu0 0.0
  %76 = vmatprep.subr.mxu0 0.0
  %77 = vmatpush2.msra.mxu0 0.0
  %78 = vmatprep.subr.mxu0 0.0
  %79 = vmatpush2.msra.mxu0 0.0
  %80 = vmatprep.subr.mxu0 0.0
  %81 = vmatpush2.msra.mxu0 0.0
  %82 = vmatprep.subr.mxu0 0.0
  %83 = vmatpush2.msra.mxu0 0.0
  %84 = vmatprep.subr.mxu0 0.0
  %85 = vmatpush2.msra.mxu0 0.0
  %86 = vmatprep.subr.mxu0 0.0
  %87 = vmatpush2.msra.mxu0 0.0
  %88 = vmatprep.subr.mxu0 0.0
  %89 = vmatpush2.msra.mxu0 0.0
  %90 = vmatprep.subr.mxu0 0.0
  %91 = vmatpush2.msra.mxu0 0.0
  %92 = vmatprep.subr.mxu0 0.0
  %93 = vmatpush2.msra.mxu0 0.0
  %94 = vmatprep.mubr.f32.mxu0 0.0
  %95 = vmatmul.mubr.f32.gmra.mxu0 %v25
  %v96 = vpop.f32.mrf.mxu0
  %v97 = vadd.f32 0.0, %v96
  %v98 = vpop.f32.mrf.mxu0
  %99 = vmatprep.mubr.f32.mxu0 0.0
  %100 = vmatmul.mubr.f32.gmra.mxu0 %v28
  %v101 = vpop.f32.mrf.mxu0
  %v102 = vadd.f32 0.0, %v101
  %v103 = vpop.f32.mrf.mxu0
  %104 = vdwg.mxu0
  %v105 = vlaneseq
  %v106 = vand.u32 %v105, 127
  %v107 = vand.u32 %v106, 15
  %108 = vrot.lane.b32.xlu0 %v97, 1
  %v109 = vpop.permute.xlu0 %108
  %110 = vrot.lane.b32.xlu0 %v102, 1
  %v111 = vpop.permute.xlu0 %110
  %112 = vrot.lane.b32.xlu0 %v97, 113
  %v113 = vpop.permute.xlu0 %112
  %114 = vrot.lane.b32.xlu0 %v102, 113
  %v115 = vpop.permute.xlu0 %114
  %vm116 = vcmp.lt.s32.totalorder %v107, 1
  %v117 = vsel %vm116, %v113, %v109
  %v118 = vsel %vm116, %v115, %v111
  %v119 = vmax.f32 %v97, %v117
  %v120 = vmax.f32 %v102, %v118
  %121 = vrot.lane.b32.xlu0 %v119, 2
  %v122 = vpop.permute.xlu0 %121
  %123 = vrot.lane.b32.xlu0 %v120, 2
  %v124 = vpop.permute.xlu0 %123
  %125 = vrot.lane.b32.xlu0 %v119, 114
  %v126 = vpop.permute.xlu0 %125
  %127 = vrot.lane.b32.xlu0 %v120, 114
  %v128 = vpop.permute.xlu0 %127
  %vm129 = vcmp.lt.s32.totalorder %v107, 2
  %v130 = vsel %vm129, %v126, %v122
  %v131 = vsel %vm129, %v128, %v124
  %v132 = vmax.f32 %v119, %v130
  %v133 = vmax.f32 %v120, %v131
  %134 = vrot.lane.b32.xlu0 %v132, 4
  %v135 = vpop.permute.xlu0 %134
  %136 = vrot.lane.b32.xlu0 %v133, 4
  %v137 = vpop.permute.xlu0 %136
  %138 = vrot.lane.b32.xlu0 %v132, 116
  %v139 = vpop.permute.xlu0 %138
  %140 = vrot.lane.b32.xlu0 %v133, 116
  %v141 = vpop.permute.xlu0 %140
  %vm142 = vcmp.lt.s32.totalorder %v107, 4
  %v143 = vsel %vm142, %v139, %v135
  %v144 = vsel %vm142, %v141, %v137
  %v145 = vmax.f32 %v132, %v143
  %v146 = vmax.f32 %v133, %v144
  %147 = vrot.lane.b32.xlu0 %v145, 8
  %v148 = vpop.permute.xlu0 %147
  %149 = vrot.lane.b32.xlu0 %v146, 8
  %v150 = vpop.permute.xlu0 %149
  %151 = vrot.lane.b32.xlu0 %v145, 120
  %v152 = vpop.permute.xlu0 %151
  %153 = vrot.lane.b32.xlu0 %v146, 120
  %v154 = vpop.permute.xlu0 %153
  %vm155 = vcmp.lt.s32.totalorder %v107, 8
  %v156 = vsel %vm155, %v152, %v148
  %v157 = vsel %vm155, %v154, %v150
  %v158 = vmax.f32 %v145, %v156
  %v159 = vmax.f32 %v146, %v157
  %vm160 = vcmp.eq.f32.partialorder %v97, %v158
  %vm161 = vcmp.eq.f32.partialorder %v102, %v159
  %v162 = vsel %vm160, %v107, 16
  %v163 = vsel %vm161, %v107, 16
  %164 = vrot.lane.b32.xlu0 %v162, 1
  %v165 = vpop.permute.xlu0 %164
  %166 = vrot.lane.b32.xlu0 %v163, 1
  %v167 = vpop.permute.xlu0 %166
  %168 = vrot.lane.b32.xlu0 %v162, 113
  %v169 = vpop.permute.xlu0 %168
  %170 = vrot.lane.b32.xlu0 %v163, 113
  %v171 = vpop.permute.xlu0 %170
  %v172 = vsel %vm116, %v169, %v165
  %v173 = vsel %vm116, %v171, %v167
  %vm174 = vcmp.lt.s32.totalorder %v162, %v172
  %v175 = vsel %vm174, %v162, %v172
  %vm176 = vcmp.lt.s32.totalorder %v163, %v173
  %v177 = vsel %vm176, %v163, %v173
  %178 = vrot.lane.b32.xlu0 %v175, 2
  %v179 = vpop.permute.xlu0 %178
  %180 = vrot.lane.b32.xlu0 %v177, 2
  %v181 = vpop.permute.xlu0 %180
  %182 = vrot.lane.b32.xlu0 %v175, 114
  %v183 = vpop.permute.xlu0 %182
  %184 = vrot.lane.b32.xlu0 %v177, 114
  %v185 = vpop.permute.xlu0 %184
  %v186 = vsel %vm129, %v183, %v179
  %v187 = vsel %vm129, %v185, %v181
  %vm188 = vcmp.lt.s32.totalorder %v175, %v186
  %v189 = vsel %vm188, %v175, %v186
  %vm190 = vcmp.lt.s32.totalorder %v177, %v187
  %v191 = vsel %vm190, %v177, %v187
  %192 = vrot.lane.b32.xlu0 %v189, 4
  %v193 = vpop.permute.xlu0 %192
  %194 = vrot.lane.b32.xlu0 %v191, 4
  %v195 = vpop.permute.xlu0 %194
  %196 = vrot.lane.b32.xlu0 %v189, 116
  %v197 = vpop.permute.xlu0 %196
  %198 = vrot.lane.b32.xlu0 %v191, 116
  %v199 = vpop.permute.xlu0 %198
  %v200 = vsel %vm142, %v197, %v193
  %v201 = vsel %vm142, %v199, %v195
  %vm202 = vcmp.lt.s32.totalorder %v189, %v200
  %v203 = vsel %vm202, %v189, %v200
  %vm204 = vcmp.lt.s32.totalorder %v191, %v201
  %v205 = vsel %vm204, %v191, %v201
  %206 = vrot.lane.b32.xlu0 %v203, 8
  %v207 = vpop.permute.xlu0 %206
  %208 = vrot.lane.b32.xlu0 %v205, 8
  %v209 = vpop.permute.xlu0 %208
  %210 = vrot.lane.b32.xlu0 %v203, 120
  %v211 = vpop.permute.xlu0 %210
  %212 = vrot.lane.b32.xlu0 %v205, 120
  %v213 = vpop.permute.xlu0 %212
  %v214 = vsel %vm155, %v211, %v207
  %v215 = vsel %vm155, %v213, %v209
  %vm216 = vcmp.lt.s32.totalorder %v203, %v214
  %v217 = vsel %vm216, %v203, %v214
  %vm218 = vcmp.lt.s32.totalorder %v205, %v215
  %v219 = vsel %vm218, %v205, %v215
  %vm220 = vcmp.eq.s32.totalorder %v107, %v217
  %vm221 = vcmp.eq.s32.totalorder %v107, %v219
  %v222 = vsel %vm220, 1, 0
  %v223 = vsel %vm221, 1, 0
  %v224 = vcvt.s32.f32 %v222
  %v225 = vcvt.s32.f32 %v223
  %v226 = vld [vmem:[%s2] sm:$0xff]
  %v227 = vld [vmem:[%s2 + $0x8] sm:$0xff]
  %v228 = vld [vmem:[%s2 + $0x10] sm:$0xff]
  %v229 = vld [vmem:[%s2 + $0x18] sm:$0xff]
  %v230 = vld [vmem:[%s2 + $0x20] sm:$0xff]
  %v231 = vld [vmem:[%s2 + $0x28] sm:$0xff]
  %v232 = vld [vmem:[%s2 + $0x30] sm:$0xff]
  %v233 = vld [vmem:[%s2 + $0x38] sm:$0xff]
  %v234 = vld [vmem:[%s2 + $0x40] sm:$0xff]
  %v235 = vld [vmem:[%s2 + $0x48] sm:$0xff]
  %v236 = vld [vmem:[%s2 + $0x50] sm:$0xff]
  %v237 = vld [vmem:[%s2 + $0x58] sm:$0xff]
  %v238 = vld [vmem:[%s2 + $0x60] sm:$0xff]
  %v239 = vld [vmem:[%s2 + $0x68] sm:$0xff]
  %v240 = vld [vmem:[%s2 + $0x70] sm:$0xff]
  %v241 = vld [vmem:[%s2 + $0x78] sm:$0xff]
  %242 = vmatprep.subr.mxu0 0.0
  %243 = vmatpush1.msra.mxu0 %v241
  %244 = vmatprep.subr.mxu0 0.0
  %245 = vmatpush1.msra.mxu0 %v240
  %246 = vmatprep.subr.mxu0 0.0
  %247 = vmatpush1.msra.mxu0 %v239
  %248 = vmatprep.subr.mxu0 0.0
  %249 = vmatpush1.msra.mxu0 %v238
  %250 = vmatprep.subr.mxu0 0.0
  %251 = vmatpush1.msra.mxu0 %v237
  %252 = vmatprep.subr.mxu0 0.0
  %253 = vmatpush1.msra.mxu0 %v236
  %254 = vmatprep.subr.mxu0 0.0
  %255 = vmatpush1.msra.mxu0 %v235
  %256 = vmatprep.subr.mxu0 0.0
  %257 = vmatpush1.msra.mxu0 %v234
  %258 = vmatprep.subr.mxu0 0.0
  %259 = vmatpush1.msra.mxu0 %v233
  %260 = vmatprep.subr.mxu0 0.0
  %261 = vmatpush1.msra.mxu0 %v232
  %262 = vmatprep.subr.mxu0 0.0
  %263 = vmatpush1.msra.mxu0 %v231
  %264 = vmatprep.subr.mxu0 0.0
  %265 = vmatpush1.msra.mxu0 %v230
  %266 = vmatprep.subr.mxu0 0.0
  %267 = vmatpush1.msra.mxu0 %v229
  %268 = vmatprep.subr.mxu0 0.0
  %269 = vmatpush1.msra.mxu0 %v228
  %270 = vmatprep.subr.mxu0 0.0
  %271 = vmatpush1.msra.mxu0 %v227
  %272 = vmatprep.subr.mxu0 0.0
  %273 = vmatpush1.msra.mxu0 %v226
  %274 = vmatprep.subr.mxu0 0.0
  %275 = vmatpush2.msra.mxu0 0.0
  %276 = vmatprep.subr.mxu0 0.0
  %277 = vmatpush2.msra.mxu0 0.0
  %278 = vmatprep.subr.mxu0 0.0
  %279 = vmatpush2.msra.mxu0 0.0
  %280 = vmatprep.subr.mxu0 0.0
  %281 = vmatpush2.msra.mxu0 0.0
  %282 = vmatprep.subr.mxu0 0.0
  %283 = vmatpush2.msra.mxu0 0.0
  %284 = vmatprep.subr.mxu0 0.0
  %285 = vmatpush2.msra.mxu0 0.0
  %286 = vmatprep.subr.mxu0 0.0
  %287 = vmatpush2.msra.mxu0 0.0
  %288 = vmatprep.subr.mxu0 0.0
  %289 = vmatpush2.msra.mxu0 0.0
  %290 = vmatprep.subr.mxu0 0.0
  %291 = vmatpush2.msra.mxu0 0.0
  %292 = vmatprep.subr.mxu0 0.0
  %293 = vmatpush2.msra.mxu0 0.0
  %294 = vmatprep.subr.mxu0 0.0
  %295 = vmatpush2.msra.mxu0 0.0
  %296 = vmatprep.subr.mxu0 0.0
  %297 = vmatpush2.msra.mxu0 0.0
  %298 = vmatprep.subr.mxu0 0.0
  %299 = vmatpush2.msra.mxu0 0.0
  %300 = vmatprep.subr.mxu0 0.0
  %301 = vmatpush2.msra.mxu0 0.0
  %302 = vmatprep.subr.mxu0 0.0
  %303 = vmatpush2.msra.mxu0 0.0
  %304 = vmatprep.subr.mxu0 0.0
  %305 = vmatpush2.msra.mxu0 0.0
  %306 = vmatprep.mubr.f32.mxu0 0.0
  %307 = vmatmul.mubr.f32.gmra.mxu0 %v224
  %v308 = vpop.f32.mrf.mxu0
  %v309 = vadd.f32 0.0, %v308
  %v310 = vpop.f32.mrf.mxu0
  %311 = vmatprep.mubr.f32.mxu0 0.0
  %312 = vmatmul.mubr.f32.gmra.mxu0 %v225
  %v313 = vpop.f32.mrf.mxu0
  %v314 = vadd.f32 0.0, %v313
  %v315 = vpop.f32.mrf.mxu0
  %316 = vdwg.mxu0
  %v317 = vld [vmem:[%s3 + $0x1] sm:$0x1]
  %v318 = vlaneseq
  %v319 = vshrl.u32 %v318, 7
  %v320 = vsub.s32 0, %v319
  %v321 = vrot.slane %v317, %v320
  %v322 = vmul.f32 %v309, %v321
  %v323 = vmul.f32 %v314, %v321
  %v324 = vld [vmem:[%s3] sm:$0x1]
  %v325 = vlaneseq
  %v326 = vshrl.u32 %v325, 7
  %v327 = vsub.s32 0, %v326
  %v328 = vrot.slane %v324, %v327
  %v329 = vadd.f32 %v322, %v328
  %v330 = vadd.f32 %v323, %v328
  %331 = vst [vmem:[%s4] sm:$0xff] %v329
  %332 = vst [vmem:[%s4 + $0x8] sm:$0xff] %v330
  // Predicated region
  $region18: #{amm_linear_forward.1} parent=0 // pred_check
    _
  $region19: #{amm_linear_forward.1} parent=0 // pred_check_branch
    %334 = sbr.rel (0) target = $region21
  $region20: #{amm_linear_forward.1} parent=0 // pred_region
    _
  $region21: #{amm_linear_forward.1} parent=0 // pred_fallthru
    _
  // Predicated region
  $region22: #{amm_linear_forward.1} parent=0 // pred_check
    _
  $region23: #{amm_linear_forward.1} parent=0 // pred_check_branch
    %336 = sbr.rel (0) target = $region25
  $region24: #{amm_linear_forward.1} parent=0 // pred_region
    _
  $region25: #{amm_linear_forward.1} parent=0 // pred_fallthru
    _

</llo_original>
